<compile_context>
chip_gen: v7x
topology: tpu7x:2x2x1
jax: 0.10.0
libtpu: 0.0.40
codegen_flags: <defaults>
</compile_context>

<pallas_src>
import math

import jax
import jax.numpy as jnp
from jax.experimental import pallas as pl
from jax.experimental.pallas import tpu as pltpu


def autoencoder_kernel(x_ref,
                       w1_ref, b1_ref,
                       w2_ref, b2_ref,
                       w7_ref, b7_ref,
                       w8t_ref, b8_ref,
                       o_ref):
    # x_ref: (TILE_B, length) f32.  Transpose in-kernel (XLU has slack) so all
    # compute is lane-dense with the batch tile on the 128-wide lane axis.
    xt = x_ref[...].T                                       # (length, TILE_B)

    # lin1 + tanh : (20, length) @ (length, TILE_B) -> (20, TILE_B)
    h = jnp.tanh(
        jnp.dot(w1_ref[...], xt, preferred_element_type=jnp.float32)
        + b1_ref[...])
    # lin2 + tanh ; Dropout(p=0.05) is identity in eval mode.
    # TODO(synk): training-mode dropout could be added via pltpu.prng_random_bits.
    h = jnp.tanh(
        jnp.dot(w2_ref[...], h, preferred_element_type=jnp.float32)
        + b2_ref[...])
    # lin7 + tanh
    h = jnp.tanh(
        jnp.dot(w7_ref[...], h, preferred_element_type=jnp.float32)
        + b7_ref[...])
    # lin8 (no activation): (TILE_B, 20) @ (20, length) -> (TILE_B, length).
    # Transposing the small (20, TILE_B) intermediate keeps the output store in
    # the native (batch, length) HBM layout (no wrapper transpose needed).
    y = jnp.dot(h.T, w8t_ref[...], preferred_element_type=jnp.float32)
    o_ref[...] = (y + b8_ref[...]).astype(o_ref.dtype)


def _padded_vmem_bytes(shape):
    """f32 VMEM footprint of a 2-D block under (8,128) layout tiling."""
    r, c = shape
    return pl.cdiv(r, 8) * 8 * pl.cdiv(c, 128) * 128 * 4


def autoencoder_forward(x, params, tile_b=None, donate_input=False):
    """x: (B, length) float32.  params: PyTorch-native (out,in) weights and
    (out,1) biases.  Returns (B, length) float32."""
    B, length = x.shape
    x = x.astype(jnp.float32)

    # ---- batch-tile selection (no wrapper pad: ragged last block is masked).
    row_bytes = pl.cdiv(length, 128) * 128 * 4       # lane-padded bytes per row
    if tile_b is None:
        tile_b = max(1024, (4 << 20) // (length * 4))      # ~4 MiB raw block
    # 2x double-buffered I/O blocks + ~2 block-sized compute temps must fit a
    # v7x-safe VMEM budget (64 MiB/TC): keep total <= ~40 MiB (8x one block).
    tile_b = min(tile_b, max(8, (40 << 20) // (8 * row_bytes)))
    # v7x: keep at least 2 grid tiles so the "parallel" axis feeds both TCs.
    if B >= 16:
        tile_b = min(tile_b, pl.cdiv(pl.cdiv(B, 2), 8) * 8)
    if tile_b >= B:
        tile_b = B                                   # single full-batch block
    else:
        tile_b = max(8, (tile_b // 8) * 8)           # sublane-aligned blocks
    num_tiles = pl.cdiv(B, tile_b)

    io_spec = pl.BlockSpec((tile_b, length), lambda i: (i, 0))

    def resident(a):
        # Full-array block + constant index_map -> stays in VMEM across grid.
        return pl.BlockSpec(a.shape, lambda i: (0, 0))

    # w8 pre-transposed to (20, length) and b8 as a (1, length) row: avoids the
    # 20 -> 128 lane padding of a (length, 20) VMEM block.  Both are tiny ops.
    w8t = params["w8"].T
    b8_row = params["b8"].reshape(1, length)
    weights = (params["w1"], params["b1"],
               params["w2"], params["b2"],
               params["w7"], params["b7"],
               w8t, b8_row)

    # ---- VMEM budget from layout-padded footprints.
    io_block_bytes = pl.cdiv(tile_b, 8) * 8 * row_bytes
    weight_bytes = sum(2 * _padded_vmem_bytes(w.shape) for w in weights)
    vmem_limit = 8 * io_block_bytes + weight_bytes + (4 << 20)
    vmem_limit = int(min(max(vmem_limit, 16 << 20), 100 << 20))

    out = pl.pallas_call(
        autoencoder_kernel,
        out_shape=jax.ShapeDtypeStruct((B, length), jnp.float32),
        grid=(num_tiles,),
        in_specs=[io_spec] + [resident(w) for w in weights],
        out_specs=io_spec,
        input_output_aliases={0: 0} if donate_input else {},
        compiler_params=pltpu.CompilerParams(
            dimension_semantics=("parallel",),   # v7x: shard batch over 2 TCs
            vmem_limit_bytes=vmem_limit,
        ),
    )(x, *weights)
    return out


def init_params(key, length):
    """Deterministic init matching the module's __init__ shapes.

    Weights are PyTorch-native (out_features, in_features), U(-2, 2) as in the
    module; biases are (out_features, 1) columns with the PyTorch default
    U(-1/sqrt(in), 1/sqrt(in))."""
    ks = jax.random.split(key, 8)

    def w(k, fan_out, fan_in):
        return jax.random.uniform(k, (fan_out, fan_in), jnp.float32, -2.0, 2.0)

    def b(k, fan_in, fan_out):
        bound = 1.0 / math.sqrt(fan_in)
        return jax.random.uniform(k, (fan_out, 1), jnp.float32, -bound, bound)

    return {
        "w1": w(ks[0], 20, length), "b1": b(ks[1], length, 20),
        "w2": w(ks[2], 10, 20),     "b2": b(ks[3], 20, 10),
        "w7": w(ks[4], 20, 10),     "b7": b(ks[5], 10, 20),
        "w8": w(ks[6], length, 20), "b8": b(ks[7], 20, length),
    }


def reference_forward(x, p):
    h = jnp.tanh(x @ p["w1"].T + p["b1"].T)
    h = jnp.tanh(h @ p["w2"].T + p["b2"].T)   # dropout = identity (eval)
    h = jnp.tanh(h @ p["w7"].T + p["b7"].T)
    return h @ p["w8"].T + p["b8"].T


if __name__ == "__main__":
    key = jax.random.PRNGKey(0)
    k_x, k_p = jax.random.split(key)

    B, LENGTH = 8, 32
    params = init_params(k_p, LENGTH)

    # Single-tile path.
    x = jax.random.normal(k_x, (B, LENGTH), jnp.float32)
    out = jax.block_until_ready(autoencoder_forward(x, params))
    ref = reference_forward(x, params)
    assert out.shape == (B, LENGTH)
    assert jnp.allclose(out, ref, atol=1e-4, rtol=1e-4), float(
        jnp.max(jnp.abs(out - ref)))

    # Multi-tile + ragged last block path (no wrapper pad / transpose).
    B2 = 200
    x2 = jax.random.normal(k_x, (B2, LENGTH), jnp.float32)
    out2 = jax.block_until_ready(autoencoder_forward(x2, params, tile_b=64))
    ref2 = reference_forward(x2, params)
    assert out2.shape == (B2, LENGTH)
    assert jnp.allclose(out2, ref2, atol=1e-4, rtol=1e-4), float(
        jnp.max(jnp.abs(out2 - ref2)))

    print("KERNEL_OK")
</pallas_src>

<mosaic_0001>
module attributes {stable_mosaic.version = 11 : i64} {
  func.func @autoencoder_kernel(%arg0: i32, %arg1: memref<8x32xf32, #tpu.memory_space<vmem>>, %arg2: memref<20x32xf32, #tpu.memory_space<vmem>>, %arg3: memref<20x1xf32, #tpu.memory_space<vmem>>, %arg4: memref<10x20xf32, #tpu.memory_space<vmem>>, %arg5: memref<10x1xf32, #tpu.memory_space<vmem>>, %arg6: memref<20x10xf32, #tpu.memory_space<vmem>>, %arg7: memref<20x1xf32, #tpu.memory_space<vmem>>, %arg8: memref<20x32xf32, #tpu.memory_space<vmem>>, %arg9: memref<1x32xf32, #tpu.memory_space<vmem>>, %arg10: memref<8x32xf32, #tpu.memory_space<vmem>>) attributes {dimension_semantics = [#tpu.dimension_semantics<parallel>], iteration_bounds = array<i64: 1>, scalar_prefetch = 0 : i64, scratch_operands = 0 : i64, tpu.core_type = #tpu.core_type<tc>, window_params = [{transform_indices = @transform_0, window_bounds = array<i64: 8, 32>}, {pipeline_mode = #tpu.pipeline_mode<synchronous>, transform_indices = @transform_1, window_bounds = array<i64: 20, 32>}, {pipeline_mode = #tpu.pipeline_mode<synchronous>, transform_indices = @transform_2, window_bounds = array<i64: 20, 1>}, {pipeline_mode = #tpu.pipeline_mode<synchronous>, transform_indices = @transform_3, window_bounds = array<i64: 10, 20>}, {pipeline_mode = #tpu.pipeline_mode<synchronous>, transform_indices = @transform_4, window_bounds = array<i64: 10, 1>}, {pipeline_mode = #tpu.pipeline_mode<synchronous>, transform_indices = @transform_5, window_bounds = array<i64: 20, 10>}, {pipeline_mode = #tpu.pipeline_mode<synchronous>, transform_indices = @transform_6, window_bounds = array<i64: 20, 1>}, {pipeline_mode = #tpu.pipeline_mode<synchronous>, transform_indices = @transform_7, window_bounds = array<i64: 20, 32>}, {pipeline_mode = #tpu.pipeline_mode<synchronous>, transform_indices = @transform_8, window_bounds = array<i64: 1, 32>}, {transform_indices = @transform_9, window_bounds = array<i64: 8, 32>}]} {
    %c0 = arith.constant 0 : index
    %c0_0 = arith.constant 0 : index
    %0 = vector.load %arg1[%c0, %c0_0] : memref<8x32xf32, #tpu.memory_space<vmem>>, vector<8x32xf32>
    %1 = tpu.transpose %0, [1, 0] : vector<8x32xf32> -> vector<32x8xf32>
    %c0_1 = arith.constant 0 : index
    %c0_2 = arith.constant 0 : index
    %2 = vector.load %arg2[%c0_1, %c0_2] : memref<20x32xf32, #tpu.memory_space<vmem>>, vector<20x32xf32>
    %cst = arith.constant dense<0.000000e+00> : vector<20x8xf32>
    %3 = tpu.matmul %2, %1, %cst {dimension_numbers = #tpu.dot_dimension_numbers<[1], [0], [0], [1], [0, 0, 1, 1], [], []>} : vector<20x32xf32>, vector<32x8xf32>, vector<20x8xf32> -> vector<20x8xf32>
    %c0_3 = arith.constant 0 : index
    %c0_4 = arith.constant 0 : index
    %4 = vector.load %arg3[%c0_3, %c0_4] : memref<20x1xf32, #tpu.memory_space<vmem>>, vector<20x1xf32>
    %5 = vector.broadcast %4 : vector<20x1xf32> to vector<20x8xf32>
    %6 = arith.addf %3, %5 : vector<20x8xf32>
    %7 = math.tanh %6 : vector<20x8xf32>
    %c0_5 = arith.constant 0 : index
    %c0_6 = arith.constant 0 : index
    %8 = vector.load %arg4[%c0_5, %c0_6] : memref<10x20xf32, #tpu.memory_space<vmem>>, vector<10x20xf32>
    %cst_7 = arith.constant dense<0.000000e+00> : vector<10x8xf32>
    %9 = tpu.matmul %8, %7, %cst_7 {dimension_numbers = #tpu.dot_dimension_numbers<[1], [0], [0], [1], [0, 0, 1, 1], [], []>} : vector<10x20xf32>, vector<20x8xf32>, vector<10x8xf32> -> vector<10x8xf32>
    %c0_8 = arith.constant 0 : index
    %c0_9 = arith.constant 0 : index
    %10 = vector.load %arg5[%c0_8, %c0_9] : memref<10x1xf32, #tpu.memory_space<vmem>>, vector<10x1xf32>
    %11 = vector.broadcast %10 : vector<10x1xf32> to vector<10x8xf32>
    %12 = arith.addf %9, %11 : vector<10x8xf32>
    %13 = math.tanh %12 : vector<10x8xf32>
    %c0_10 = arith.constant 0 : index
    %c0_11 = arith.constant 0 : index
    %14 = vector.load %arg6[%c0_10, %c0_11] : memref<20x10xf32, #tpu.memory_space<vmem>>, vector<20x10xf32>
    %cst_12 = arith.constant dense<0.000000e+00> : vector<20x8xf32>
    %15 = tpu.matmul %14, %13, %cst_12 {dimension_numbers = #tpu.dot_dimension_numbers<[1], [0], [0], [1], [0, 0, 1, 1], [], []>} : vector<20x10xf32>, vector<10x8xf32>, vector<20x8xf32> -> vector<20x8xf32>
    %c0_13 = arith.constant 0 : index
    %c0_14 = arith.constant 0 : index
    %16 = vector.load %arg7[%c0_13, %c0_14] : memref<20x1xf32, #tpu.memory_space<vmem>>, vector<20x1xf32>
    %17 = vector.broadcast %16 : vector<20x1xf32> to vector<20x8xf32>
    %18 = arith.addf %15, %17 : vector<20x8xf32>
    %19 = math.tanh %18 : vector<20x8xf32>
    %20 = tpu.transpose %19, [1, 0] : vector<20x8xf32> -> vector<8x20xf32>
    %c0_15 = arith.constant 0 : index
    %c0_16 = arith.constant 0 : index
    %21 = vector.load %arg8[%c0_15, %c0_16] : memref<20x32xf32, #tpu.memory_space<vmem>>, vector<20x32xf32>
    %cst_17 = arith.constant dense<0.000000e+00> : vector<8x32xf32>
    %22 = tpu.matmul %20, %21, %cst_17 {dimension_numbers = #tpu.dot_dimension_numbers<[1], [0], [0], [1], [0, 0, 1, 1], [], []>} : vector<8x20xf32>, vector<20x32xf32>, vector<8x32xf32> -> vector<8x32xf32>
    %c0_18 = arith.constant 0 : index
    %c0_19 = arith.constant 0 : index
    %23 = vector.load %arg9[%c0_18, %c0_19] : memref<1x32xf32, #tpu.memory_space<vmem>>, vector<1x32xf32>
    %24 = vector.broadcast %23 : vector<1x32xf32> to vector<8x32xf32>
    %25 = arith.addf %22, %24 : vector<8x32xf32>
    %c0_20 = arith.constant 0 : index
    %c0_21 = arith.constant 0 : index
    %26 = vector.load %arg10[%c0_20, %c0_21] : memref<8x32xf32, #tpu.memory_space<vmem>>, vector<8x32xf32>
    tpu.vector_store %arg10[%c0_20, %c0_21], %25 {strides = array<i32>} : memref<8x32xf32, #tpu.memory_space<vmem>>, vector<8x32xf32>,
    return
  }
  func.func @transform_0(%arg0: i32) -> (i32, i32) {
    %c0_i32 = arith.constant 0 : i32
    %c0_i32_0 = arith.constant 0 : i32
    return %arg0, %c0_i32 : i32, i32
  }
  func.func @transform_1(%arg0: i32) -> (i32, i32) {
    %c0_i32 = arith.constant 0 : i32
    %c0_i32_0 = arith.constant 0 : i32
    %c0_i32_1 = arith.constant 0 : i32
    return %c0_i32, %c0_i32_0 : i32, i32
  }
  func.func @transform_2(%arg0: i32) -> (i32, i32) {
    %c0_i32 = arith.constant 0 : i32
    %c0_i32_0 = arith.constant 0 : i32
    %c0_i32_1 = arith.constant 0 : i32
    return %c0_i32, %c0_i32_0 : i32, i32
  }
  func.func @transform_3(%arg0: i32) -> (i32, i32) {
    %c0_i32 = arith.constant 0 : i32
    %c0_i32_0 = arith.constant 0 : i32
    %c0_i32_1 = arith.constant 0 : i32
    return %c0_i32, %c0_i32_0 : i32, i32
  }
  func.func @transform_4(%arg0: i32) -> (i32, i32) {
    %c0_i32 = arith.constant 0 : i32
    %c0_i32_0 = arith.constant 0 : i32
    %c0_i32_1 = arith.constant 0 : i32
    return %c0_i32, %c0_i32_0 : i32, i32
  }
  func.func @transform_5(%arg0: i32) -> (i32, i32) {
    %c0_i32 = arith.constant 0 : i32
    %c0_i32_0 = arith.constant 0 : i32
    %c0_i32_1 = arith.constant 0 : i32
    return %c0_i32, %c0_i32_0 : i32, i32
  }
  func.func @transform_6(%arg0: i32) -> (i32, i32) {
    %c0_i32 = arith.constant 0 : i32
    %c0_i32_0 = arith.constant 0 : i32
    %c0_i32_1 = arith.constant 0 : i32
    return %c0_i32, %c0_i32_0 : i32, i32
  }
  func.func @transform_7(%arg0: i32) -> (i32, i32) {
    %c0_i32 = arith.constant 0 : i32
    %c0_i32_0 = arith.constant 0 : i32
    %c0_i32_1 = arith.constant 0 : i32
    return %c0_i32, %c0_i32_0 : i32, i32
  }
  func.func @transform_8(%arg0: i32) -> (i32, i32) {
    %c0_i32 = arith.constant 0 : i32
    %c0_i32_0 = arith.constant 0 : i32
    %c0_i32_1 = arith.constant 0 : i32
    return %c0_i32, %c0_i32_0 : i32, i32
  }
  func.func @transform_9(%arg0: i32) -> (i32, i32) {
    %c0_i32 = arith.constant 0 : i32
    %c0_i32_0 = arith.constant 0 : i32
    return %arg0, %c0_i32 : i32, i32
  }
}

</mosaic_0001>

<llo_original>
// kernel: tpu_custom_call.1
$region0: #{tpu_custom_call.1}
  #allocation0 [shape = 'u32[]', space=smem, size = 0x4, offset = 0x4, fixed_abs, tag = 'smem constant byte address 0x4 - core index']
  #allocation1 [shape = 'u32[144,128]{1,0:T(1,128)}', space=vmem, size = 0x12000, scoped, tag = 'internal scratch']
  %s0 = inlined_call_operand.vmem [shape: f32[8,32], index: 0, kind: input, shape index: {}]
  %s1 = inlined_call_operand.vmem [shape: f32[20,32], index: 1, kind: input, shape index: {}]
  %s2 = inlined_call_operand.vmem [shape: f32[20,1], index: 2, kind: input, shape index: {}]
  %s3 = inlined_call_operand.vmem [shape: f32[10,20], index: 3, kind: input, shape index: {}]
  %s4 = inlined_call_operand.vmem [shape: f32[10,1], index: 4, kind: input, shape index: {}]
  %s5 = inlined_call_operand.vmem [shape: f32[20,10], index: 5, kind: input, shape index: {}]
  %s6 = inlined_call_operand.vmem [shape: f32[20,1], index: 6, kind: input, shape index: {}]
  %s7 = inlined_call_operand.vmem [shape: f32[20,32], index: 7, kind: input, shape index: {}]
  %s8 = inlined_call_operand.vmem [shape: f32[1,32], index: 8, kind: input, shape index: {}]
  %s9 = inlined_call_operand.hbm [shape: f32[8,32], index: 9, kind: output, shape index: {}]
  %s10 = sld [smem:[#allocation0]]
  $region46: #{tpu_custom_call.1} parent=0
    _
  %s12 = ssub.s32 1, %s10
  %s13 = scalar_select 0, %s12, %s10
  $region1: #{tpu_custom_call.1} parent=0
    #allocation2 [shape = 'u8[4096]{0}', space=vmem, size = 0x1000, scoped, tag = 'output window, operand 0, single buffered']
    #allocation3 [shape = 's32[1]{0}', space=sflag, size = 0x4, scoped, tag = 'scoped memory for tpu_custom_call.1']
    %14 = vsyncpa [#allocation3], 0
    // Predicated region
    $region2: #{tpu_custom_call.1} parent=1 // pred_check
      _
    $region3: #{tpu_custom_call.1} parent=1 // pred_check_branch
      %16 = sbr.rel (0) target = $region5
    $region4: #{tpu_custom_call.1} parent=1 // pred_region
      _
    $region5: #{tpu_custom_call.1} parent=1 // pred_fallthru
      _
    // Predicated region
    $region6: #{tpu_custom_call.1} parent=1 // pred_check
      _
    $region7: #{tpu_custom_call.1} parent=1 // pred_check_branch
      %18 = sbr.rel (0) target = $region9
    $region8: #{tpu_custom_call.1} parent=1 // pred_region
      _
    $region9: #{tpu_custom_call.1} parent=1 // pred_fallthru
      _
    // Predicated region
    $region10: #{tpu_custom_call.1} parent=1 // pred_check
      _
    $region11: #{tpu_custom_call.1} parent=1 // pred_check_branch
      %20 = sbr.rel (0) target = $region13
    $region12: #{tpu_custom_call.1} parent=1 // pred_region
      _
    $region13: #{tpu_custom_call.1} parent=1 // pred_fallthru
      _
    // Predicated region
    $region14: #{tpu_custom_call.1} parent=1 // pred_check
      _
    $region15: #{tpu_custom_call.1} parent=1 // pred_check_branch
      %22 = sbr.rel (0) target = $region17
    $region16: #{tpu_custom_call.1} parent=1 // pred_region
      _
    $region17: #{tpu_custom_call.1} parent=1 // pred_fallthru
      _
    // Predicated region
    $region18: #{tpu_custom_call.1} parent=1 // pred_check
      _
    $region19: #{tpu_custom_call.1} parent=1 // pred_check_branch
      %24 = sbr.rel (0) target = $region21
    $region20: #{tpu_custom_call.1} parent=1 // pred_region
      _
    $region21: #{tpu_custom_call.1} parent=1 // pred_fallthru
      _
    // Predicated region
    $region22: #{tpu_custom_call.1} parent=1 // pred_check
      _
    $region23: #{tpu_custom_call.1} parent=1 // pred_check_branch
      %26 = sbr.rel (0) target = $region25
    $region24: #{tpu_custom_call.1} parent=1 // pred_region
      _
    $region25: #{tpu_custom_call.1} parent=1 // pred_fallthru
      _
    // Predicated region
    $region26: #{tpu_custom_call.1} parent=1 // pred_check
      _
    $region27: #{tpu_custom_call.1} parent=1 // pred_check_branch
      %28 = sbr.rel (0) target = $region29
    $region28: #{tpu_custom_call.1} parent=1 // pred_region
      _
    $region29: #{tpu_custom_call.1} parent=1 // pred_fallthru
      _
    // Predicated region
    $region30: #{tpu_custom_call.1} parent=1 // pred_check
      _
    $region31: #{tpu_custom_call.1} parent=1 // pred_check_branch
      %30 = sbr.rel (0) target = $region33
    $region32: #{tpu_custom_call.1} parent=1 // pred_region
      _
    $region33: #{tpu_custom_call.1} parent=1 // pred_fallthru
      _
    // Predicated region
    $region34: #{tpu_custom_call.1} parent=1 // pred_check
      _
    $region35: #{tpu_custom_call.1} parent=1 // pred_check_branch
      %32 = sbr.rel (0) target = $region37
    $region36: #{tpu_custom_call.1} parent=1 // pred_region
      _
    $region37: #{tpu_custom_call.1} parent=1 // pred_fallthru
      _
    %v33 = vld [vmem:[%s0] sm:$0xff]
    %v34 = vld [vmem:[%s1] sm:$0xff]
    %v35 = vld [vmem:[%s1 + $0x8] sm:$0xff]
    %v36 = vld [vmem:[%s1 + $0x10] sm:$0xf]
    %v37 = vld [vmem:[%s2] sm:$0xff]
    %v38 = vld [vmem:[%s2 + $0x8] sm:$0xff]
    %v39 = vld [vmem:[%s2 + $0x10] sm:$0xf]
    %41 = vset.pattern.permute.xlu0 0
    %42 = vperm.xlu0 %41, %v37
    %v43 = vpop.permute.xlu0 %42
    %46 = vset.pattern.permute.xlu0 0
    %47 = vperm.xlu0 %46, %v38
    %v48 = vpop.permute.xlu0 %47
    %51 = vset.pattern.permute.xlu0 0
    %52 = vperm.xlu0 %51, %v39
    %v53 = vpop.permute.xlu0 %52
    %vm55 = vcmask 261120
    %v57 = vsel %vm55, %v34, 0
    %v60 = vsel %vm55, %v35, 0
    %v63 = vsel %vm55, %v36, 0
    %v66 = vsel %vm55, %v33, 0
    %68 = vmatprep.subr.mxu0 0.0
    %69 = vmatpush1.xpose.msra.mxu0 %v66
    %70 = vmatprep.subr.mxu0 0.0
    %71 = vmatpush1.xpose.msra.mxu0 0.0
    %72 = vmatprep.subr.mxu0 0.0
    %73 = vmatpush1.xpose.msra.mxu0 0.0
    %74 = vmatprep.subr.mxu0 0.0
    %75 = vmatpush1.xpose.msra.mxu0 0.0
    %76 = vmatprep.subr.mxu0 0.0
    %77 = vmatpush1.xpose.msra.mxu0 0.0
    %78 = vmatprep.subr.mxu0 0.0
    %79 = vmatpush1.xpose.msra.mxu0 0.0
    %80 = vmatprep.subr.mxu0 0.0
    %81 = vmatpush1.xpose.msra.mxu0 0.0
    %82 = vmatprep.subr.mxu0 0.0
    %83 = vmatpush1.xpose.msra.mxu0 0.0
    %84 = vmatprep.subr.mxu0 0.0
    %85 = vmatpush1.xpose.msra.mxu0 0.0
    %86 = vmatprep.subr.mxu0 0.0
    %87 = vmatpush1.xpose.msra.mxu0 0.0
    %88 = vmatprep.subr.mxu0 0.0
    %89 = vmatpush1.xpose.msra.mxu0 0.0
    %90 = vmatprep.subr.mxu0 0.0
    %91 = vmatpush1.xpose.msra.mxu0 0.0
    %92 = vmatprep.subr.mxu0 0.0
    %93 = vmatpush1.xpose.msra.mxu0 0.0
    %94 = vmatprep.subr.mxu0 0.0
    %95 = vmatpush1.xpose.msra.mxu0 0.0
    %96 = vmatprep.subr.mxu0 0.0
    %97 = vmatpush1.xpose.msra.mxu0 0.0
    %98 = vmatprep.subr.mxu0 0.0
    %99 = vmatpush1.xpose.msra.mxu0 0.0
    %100 = vmatprep.subr.mxu0 0.0
    %101 = vmatpush1.xpose.msra.mxu0 0.0
    %102 = vmatprep.subr.mxu0 0.0
    %103 = vmatpush1.xpose.msra.mxu0 0.0
    %104 = vmatprep.subr.mxu0 0.0
    %105 = vmatpush1.xpose.msra.mxu0 0.0
    %106 = vmatprep.subr.mxu0 0.0
    %107 = vmatpush1.xpose.msra.mxu0 0.0
    %108 = vmatprep.subr.mxu0 0.0
    %109 = vmatpush1.xpose.msra.mxu0 0.0
    %110 = vmatprep.subr.mxu0 0.0
    %111 = vmatpush1.xpose.msra.mxu0 0.0
    %112 = vmatprep.subr.mxu0 0.0
    %113 = vmatpush1.xpose.msra.mxu0 0.0
    %114 = vmatprep.subr.mxu0 0.0
    %115 = vmatpush1.xpose.msra.mxu0 0.0
    %116 = vmatprep.subr.mxu0 0.0
    %117 = vmatpush1.xpose.msra.mxu0 0.0
    %118 = vmatprep.subr.mxu0 0.0
    %119 = vmatpush1.xpose.msra.mxu0 0.0
    %120 = vmatprep.subr.mxu0 0.0
    %121 = vmatpush1.xpose.msra.mxu0 0.0
    %122 = vmatprep.subr.mxu0 0.0
    %123 = vmatpush1.xpose.msra.mxu0 0.0
    %124 = vmatprep.subr.mxu0 0.0
    %125 = vmatpush1.xpose.msra.mxu0 0.0
    %126 = vmatprep.subr.mxu0 0.0
    %127 = vmatpush1.xpose.msra.mxu0 0.0
    %128 = vmatprep.subr.mxu0 0.0
    %129 = vmatpush1.xpose.msra.mxu0 0.0
    %130 = vmatprep.subr.mxu0 0.0
    %131 = vmatpush1.xpose.msra.mxu0 0.0
    %132 = vmatprep.mubr.f32.mxu0 0.0
    %133 = vmatmul.mubr.f32.gmra.mrb[0].mxu0 %v57
    %v134 = vpop.f32.mrb[0].mxu0
    %v135 = vadd.f32 %v43, %v134
    %v136 = vpop.f32.mrb[0].mxu0
    %137 = vmatprep.mubr.f32.mxu0 0.0
    %138 = vmatmul.mubr.f32.gmra.mrb[0].mxu0 %v60
    %v139 = vpop.f32.mrb[0].mxu0
    %v140 = vadd.f32 %v48, %v139
    %v141 = vpop.f32.mrb[0].mxu0
    %142 = vmatprep.mubr.f32.mxu0 0.0
    %143 = vmatmul.mubr.f32.gmra.mrb[0].mxu0 %v63
    %v144 = vpop.f32.mrb[0].mxu0
    %v145 = vadd.f32 %v53, %v144
    %v146 = vpop.f32.mrb[0].mxu0
    %147 = vdwg.mxu0
    %v148 = vtanh.pop %v135
    %v149 = vtanh.pop %v140
    %v150 = vtanh.pop %v145
    %v151 = vld [vmem:[%s3] sm:$0xff]
    %v152 = vld [vmem:[%s3 + $0x8] sm:$0x3]
    %v153 = vld [vmem:[%s4] sm:$0xff]
    %v154 = vld [vmem:[%s4 + $0x8] sm:$0x3]
    %156 = vset.pattern.permute.xlu0 0
    %157 = vperm.xlu0 %156, %v153
    %v158 = vpop.permute.xlu0 %157
    %161 = vset.pattern.permute.xlu0 0
    %162 = vperm.xlu0 %161, %v154
    %v163 = vpop.permute.xlu0 %162
    %vm165 = vcmask 162816
    %v167 = vsel %vm165, %v151, 0
    %v170 = vsel %vm165, %v152, 0
    %vm172 = vcmask 1043456
    %v174 = vsel %vm172, %v150, 0
    %176 = vmatprep.subr.mxu0 0.0
    %177 = vmatpush1.msra.mxu0 %v148
    %178 = vmatprep.subr.mxu0 0.0
    %179 = vmatpush1.msra.mxu0 %v149
    %180 = vmatprep.subr.mxu0 0.0
    %181 = vmatpush1.msra.mxu0 %v174
    %182 = vmatprep.subr.mxu0 0.0
    %183 = vmatpush1.msra.mxu0 0.0
    %184 = vmatprep.subr.mxu0 0.0
    %185 = vmatpush1.msra.mxu0 0.0
    %186 = vmatprep.subr.mxu0 0.0
    %187 = vmatpush1.msra.mxu0 0.0
    %188 = vmatprep.subr.mxu0 0.0
    %189 = vmatpush1.msra.mxu0 0.0
    %190 = vmatprep.subr.mxu0 0.0
    %191 = vmatpush1.msra.mxu0 0.0
    %192 = vmatprep.subr.mxu0 0.0
    %193 = vmatpush1.msra.mxu0 0.0
    %194 = vmatprep.subr.mxu0 0.0
    %195 = vmatpush1.msra.mxu0 0.0
    %196 = vmatprep.subr.mxu0 0.0
    %197 = vmatpush1.msra.mxu0 0.0
    %198 = vmatprep.subr.mxu0 0.0
    %199 = vmatpush1.msra.mxu0 0.0
    %200 = vmatprep.subr.mxu0 0.0
    %201 = vmatpush1.msra.mxu0 0.0
    %202 = vmatprep.subr.mxu0 0.0
    %203 = vmatpush1.msra.mxu0 0.0
    %204 = vmatprep.subr.mxu0 0.0
    %205 = vmatpush1.msra.mxu0 0.0
    %206 = vmatprep.subr.mxu0 0.0
    %207 = vmatpush1.msra.mxu0 0.0
    %208 = vmatprep.subr.mxu0 0.0
    %209 = vmatpush1.msra.mxu0 0.0
    %210 = vmatprep.subr.mxu0 0.0
    %211 = vmatpush1.msra.mxu0 0.0
    %212 = vmatprep.subr.mxu0 0.0
    %213 = vmatpush1.msra.mxu0 0.0
    %214 = vmatprep.subr.mxu0 0.0
    %215 = vmatpush1.msra.mxu0 0.0
    %216 = vmatprep.subr.mxu0 0.0
    %217 = vmatpush1.msra.mxu0 0.0
    %218 = vmatprep.subr.mxu0 0.0
    %219 = vmatpush1.msra.mxu0 0.0
    %220 = vmatprep.subr.mxu0 0.0
    %221 = vmatpush1.msra.mxu0 0.0
    %222 = vmatprep.subr.mxu0 0.0
    %223 = vmatpush1.msra.mxu0 0.0
    %224 = vmatprep.subr.mxu0 0.0
    %225 = vmatpush1.msra.mxu0 0.0
    %226 = vmatprep.subr.mxu0 0.0
    %227 = vmatpush1.msra.mxu0 0.0
    %228 = vmatprep.subr.mxu0 0.0
    %229 = vmatpush1.msra.mxu0 0.0
    %230 = vmatprep.subr.mxu0 0.0
    %231 = vmatpush1.msra.mxu0 0.0
    %232 = vmatprep.subr.mxu0 0.0
    %233 = vmatpush1.msra.mxu0 0.0
    %234 = vmatprep.subr.mxu0 0.0
    %235 = vmatpush1.msra.mxu0 0.0
    %236 = vmatprep.subr.mxu0 0.0
    %237 = vmatpush1.msra.mxu0 0.0
    %238 = vmatprep.subr.mxu0 0.0
    %239 = vmatpush1.msra.mxu0 0.0
    %240 = vmatprep.mubr.f32.mxu0 0.0
    %241 = vmatmul.mubr.f32.gmra.mrb[0].mxu0 %v167
    %v242 = vpop.f32.mrb[0].mxu0
    %v243 = vadd.f32 %v158, %v242
    %v244 = vpop.f32.mrb[0].mxu0
    %245 = vmatprep.mubr.f32.mxu0 0.0
    %246 = vmatmul.mubr.f32.gmra.mrb[0].mxu0 %v170
    %v247 = vpop.f32.mrb[0].mxu0
    %v248 = vadd.f32 %v163, %v247
    %v249 = vpop.f32.mrb[0].mxu0
    %250 = vdwg.mxu0
    %v251 = vtanh.pop %v243
    %v252 = vtanh.pop %v248
    %v253 = vld [vmem:[%s5] sm:$0xff]
    %v254 = vld [vmem:[%s5 + $0x8] sm:$0xff]
    %v255 = vld [vmem:[%s5 + $0x10] sm:$0xf]
    %v256 = vld [vmem:[%s6] sm:$0xff]
    %v257 = vld [vmem:[%s6 + $0x8] sm:$0xff]
    %v258 = vld [vmem:[%s6 + $0x10] sm:$0xf]
    %260 = vset.pattern.permute.xlu0 0
    %261 = vperm.xlu0 %260, %v256
    %v262 = vpop.permute.xlu0 %261
    %265 = vset.pattern.permute.xlu0 0
    %266 = vperm.xlu0 %265, %v257
    %v267 = vpop.permute.xlu0 %266
    %270 = vset.pattern.permute.xlu0 0
    %271 = vperm.xlu0 %270, %v258
    %v272 = vpop.permute.xlu0 %271
    %vm274 = vcmask 80896
    %v276 = vsel %vm274, %v253, 0
    %v279 = vsel %vm274, %v254, 0
    %v282 = vsel %vm274, %v255, 0
    %vm284 = vcmask 1041408
    %v286 = vsel %vm284, %v252, 0
    %288 = vmatprep.subr.mxu0 0.0
    %289 = vmatpush1.msra.mxu0 %v251
    %290 = vmatprep.subr.mxu0 0.0
    %291 = vmatpush1.msra.mxu0 %v286
    %292 = vmatprep.subr.mxu0 0.0
    %293 = vmatpush1.msra.mxu0 0.0
    %294 = vmatprep.subr.mxu0 0.0
    %295 = vmatpush1.msra.mxu0 0.0
    %296 = vmatprep.subr.mxu0 0.0
    %297 = vmatpush1.msra.mxu0 0.0
    %298 = vmatprep.subr.mxu0 0.0
    %299 = vmatpush1.msra.mxu0 0.0
    %300 = vmatprep.subr.mxu0 0.0
    %301 = vmatpush1.msra.mxu0 0.0
    %302 = vmatprep.subr.mxu0 0.0
    %303 = vmatpush1.msra.mxu0 0.0
    %304 = vmatprep.subr.mxu0 0.0
    %305 = vmatpush1.msra.mxu0 0.0
    %306 = vmatprep.subr.mxu0 0.0
    %307 = vmatpush1.msra.mxu0 0.0
    %308 = vmatprep.subr.mxu0 0.0
    %309 = vmatpush1.msra.mxu0 0.0
    %310 = vmatprep.subr.mxu0 0.0
    %311 = vmatpush1.msra.mxu0 0.0
    %312 = vmatprep.subr.mxu0 0.0
    %313 = vmatpush1.msra.mxu0 0.0
    %314 = vmatprep.subr.mxu0 0.0
    %315 = vmatpush1.msra.mxu0 0.0
    %316 = vmatprep.subr.mxu0 0.0
    %317 = vmatpush1.msra.mxu0 0.0
    %318 = vmatprep.subr.mxu0 0.0
    %319 = vmatpush1.msra.mxu0 0.0
    %320 = vmatprep.subr.mxu0 0.0
    %321 = vmatpush1.msra.mxu0 0.0
    %322 = vmatprep.subr.mxu0 0.0
    %323 = vmatpush1.msra.mxu0 0.0
    %324 = vmatprep.subr.mxu0 0.0
    %325 = vmatpush1.msra.mxu0 0.0
    %326 = vmatprep.subr.mxu0 0.0
    %327 = vmatpush1.msra.mxu0 0.0
    %328 = vmatprep.subr.mxu0 0.0
    %329 = vmatpush1.msra.mxu0 0.0
    %330 = vmatprep.subr.mxu0 0.0
    %331 = vmatpush1.msra.mxu0 0.0
    %332 = vmatprep.subr.mxu0 0.0
    %333 = vmatpush1.msra.mxu0 0.0
    %334 = vmatprep.subr.mxu0 0.0
    %335 = vmatpush1.msra.mxu0 0.0
    %336 = vmatprep.subr.mxu0 0.0
    %337 = vmatpush1.msra.mxu0 0.0
    %338 = vmatprep.subr.mxu0 0.0
    %339 = vmatpush1.msra.mxu0 0.0
    %340 = vmatprep.subr.mxu0 0.0
    %341 = vmatpush1.msra.mxu0 0.0
    %342 = vmatprep.subr.mxu0 0.0
    %343 = vmatpush1.msra.mxu0 0.0
    %344 = vmatprep.subr.mxu0 0.0
    %345 = vmatpush1.msra.mxu0 0.0
    %346 = vmatprep.subr.mxu0 0.0
    %347 = vmatpush1.msra.mxu0 0.0
    %348 = vmatprep.subr.mxu0 0.0
    %349 = vmatpush1.msra.mxu0 0.0
    %350 = vmatprep.subr.mxu0 0.0
    %351 = vmatpush1.msra.mxu0 0.0
    %352 = vmatprep.mubr.f32.mxu0 0.0
    %353 = vmatmul.mubr.f32.gmra.mrb[0].mxu0 %v276
    %v354 = vpop.f32.mrb[0].mxu0
    %v355 = vadd.f32 %v262, %v354
    %v356 = vpop.f32.mrb[0].mxu0
    %357 = vmatprep.mubr.f32.mxu0 0.0
    %358 = vmatmul.mubr.f32.gmra.mrb[0].mxu0 %v279
    %v359 = vpop.f32.mrb[0].mxu0
    %v360 = vadd.f32 %v267, %v359
    %v361 = vpop.f32.mrb[0].mxu0
    %362 = vmatprep.mubr.f32.mxu0 0.0
    %363 = vmatmul.mubr.f32.gmra.mrb[0].mxu0 %v282
    %v364 = vpop.f32.mrb[0].mxu0
    %v365 = vadd.f32 %v272, %v364
    %v366 = vpop.f32.mrb[0].mxu0
    %367 = vdwg.mxu0
    %v368 = vtanh.pop %v355
    %v369 = vtanh.pop %v360
    %v370 = vtanh.pop %v365
    %371 = vxpose.xlu0.b32.start [1/16] %v368, 128
    %372 = vxpose.xlu0.b32.cont [2/16] %v369, 128
    %373 = vxpose.xlu0.b32.cont [3/16] %v370, 128
    %374 = vxpose.xlu0.b32.cont [4/16] 0.0, 128
    %375 = vxpose.xlu0.b32.cont [5/16] 0.0, 128
    %376 = vxpose.xlu0.b32.cont [6/16] 0.0, 128
    %377 = vxpose.xlu0.b32.cont [7/16] 0.0, 128
    %378 = vxpose.xlu0.b32.cont [8/16] 0.0, 128
    %379 = vxpose.xlu0.b32.cont [9/16] 0.0, 128
    %380 = vxpose.xlu0.b32.cont [10/16] 0.0, 128
    %381 = vxpose.xlu0.b32.cont [11/16] 0.0, 128
    %382 = vxpose.xlu0.b32.cont [12/16] 0.0, 128
    %383 = vxpose.xlu0.b32.cont [13/16] 0.0, 128
    %384 = vxpose.xlu0.b32.cont [14/16] 0.0, 128
    %385 = vxpose.xlu0.b32.cont [15/16] 0.0, 128
    %386 = vxpose.xlu0.b32.end [16/16] 0.0, 128
    %v387 = vpop.trf.xlu0
    %v388 = vpop.trf.xlu0
    %v389 = vpop.trf.xlu0
    %v390 = vpop.trf.xlu0
    %v391 = vpop.trf.xlu0
    %v392 = vpop.trf.xlu0
    %v393 = vpop.trf.xlu0
    %v394 = vpop.trf.xlu0
    %v395 = vpop.trf.xlu0
    %v396 = vpop.trf.xlu0
    %v397 = vpop.trf.xlu0
    %v398 = vpop.trf.xlu0
    %v399 = vpop.trf.xlu0
    %v400 = vpop.trf.xlu0
    %v401 = vpop.trf.xlu0
    %v402 = vpop.trf.xlu0
    %v403 = vld [vmem:[%s7] sm:$0xff]
    %v404 = vld [vmem:[%s7 + $0x8] sm:$0xff]
    %v405 = vld [vmem:[%s7 + $0x10] sm:$0xf]
    %v406 = vld [vmem:[%s8] sm:$0x1]
    %v408 = vlaneseq
    %v409 = vshrl.u32 %v408, 7
    %v410 = vsub.s32 0, %v409
    %v411 = vrot.slane %v406, %v410
    %v414 = vsel %vm165, %v387, 0
    %v417 = vsel %vm172, %v405, 0
    %419 = vmatprep.subr.mxu0 0.0
    %420 = vmatpush1.msra.mxu0 %v403
    %421 = vmatprep.subr.mxu0 0.0
    %422 = vmatpush1.msra.mxu0 %v404
    %423 = vmatprep.subr.mxu0 0.0
    %424 = vmatpush1.msra.mxu0 %v417
    %425 = vmatprep.subr.mxu0 0.0
    %426 = vmatpush1.msra.mxu0 0.0
    %427 = vmatprep.subr.mxu0 0.0
    %428 = vmatpush1.msra.mxu0 0.0
    %429 = vmatprep.subr.mxu0 0.0
    %430 = vmatpush1.msra.mxu0 0.0
    %431 = vmatprep.subr.mxu0 0.0
    %432 = vmatpush1.msra.mxu0 0.0
    %433 = vmatprep.subr.mxu0 0.0
    %434 = vmatpush1.msra.mxu0 0.0
    %435 = vmatprep.subr.mxu0 0.0
    %436 = vmatpush1.msra.mxu0 0.0
    %437 = vmatprep.subr.mxu0 0.0
    %438 = vmatpush1.msra.mxu0 0.0
    %439 = vmatprep.subr.mxu0 0.0
    %440 = vmatpush1.msra.mxu0 0.0
    %441 = vmatprep.subr.mxu0 0.0
    %442 = vmatpush1.msra.mxu0 0.0
    %443 = vmatprep.subr.mxu0 0.0
    %444 = vmatpush1.msra.mxu0 0.0
    %445 = vmatprep.subr.mxu0 0.0
    %446 = vmatpush1.msra.mxu0 0.0
    %447 = vmatprep.subr.mxu0 0.0
    %448 = vmatpush1.msra.mxu0 0.0
    %449 = vmatprep.subr.mxu0 0.0
    %450 = vmatpush1.msra.mxu0 0.0
    %451 = vmatprep.subr.mxu0 0.0
    %452 = vmatpush1.msra.mxu0 0.0
    %453 = vmatprep.subr.mxu0 0.0
    %454 = vmatpush1.msra.mxu0 0.0
    %455 = vmatprep.subr.mxu0 0.0
    %456 = vmatpush1.msra.mxu0 0.0
    %457 = vmatprep.subr.mxu0 0.0
    %458 = vmatpush1.msra.mxu0 0.0
    %459 = vmatprep.subr.mxu0 0.0
    %460 = vmatpush1.msra.mxu0 0.0
    %461 = vmatprep.subr.mxu0 0.0
    %462 = vmatpush1.msra.mxu0 0.0
    %463 = vmatprep.subr.mxu0 0.0
    %464 = vmatpush1.msra.mxu0 0.0
    %465 = vmatprep.subr.mxu0 0.0
    %466 = vmatpush1.msra.mxu0 0.0
    %467 = vmatprep.subr.mxu0 0.0
    %468 = vmatpush1.msra.mxu0 0.0
    %469 = vmatprep.subr.mxu0 0.0
    %470 = vmatpush1.msra.mxu0 0.0
    %471 = vmatprep.subr.mxu0 0.0
    %472 = vmatpush1.msra.mxu0 0.0
    %473 = vmatprep.subr.mxu0 0.0
    %474 = vmatpush1.msra.mxu0 0.0
    %475 = vmatprep.subr.mxu0 0.0
    %476 = vmatpush1.msra.mxu0 0.0
    %477 = vmatprep.subr.mxu0 0.0
    %478 = vmatpush1.msra.mxu0 0.0
    %479 = vmatprep.subr.mxu0 0.0
    %480 = vmatpush1.msra.mxu0 0.0
    %481 = vmatprep.subr.mxu0 0.0
    %482 = vmatpush1.msra.mxu0 0.0
    %483 = vmatprep.mubr.f32.mxu0 0.0
    %484 = vmatmul.mubr.f32.gmra.mrb[0].mxu0 %v414
    %v485 = vpop.f32.mrb[0].mxu0
    %v486 = vadd.f32 %v411, %v485
    %v487 = vpop.f32.mrb[0].mxu0
    %488 = vdwg.mxu0
    %489 = vst.msk [vmem:[#allocation2] sm:$0xff] %vm55, %v486
    // Predicated region
    $region38: #{tpu_custom_call.1} parent=1 // pred_check
      _
    $region39: #{tpu_custom_call.1} parent=1 // pred_check_branch
      %491 = sbr.rel (0) target = $region41
    $region40: #{tpu_custom_call.1} parent=1 // pred_region
      %s493 = ssub.s32 128, 128
      %494 = vsyncadd [#allocation3], %s493
      %s496 = sshll.u32 [#allocation2], 4
      %s497 = int_to_ptr.vmem [resolvable:$true] %s496
      %499 = dma.vmem_to_hbm [thread:$0]  %s497, 128, %s9, [#allocation3]
    $region41: #{tpu_custom_call.1} parent=1 // pred_fallthru
      _
    // Predicated region
    $region42: #{tpu_custom_call.1} parent=1 // pred_check
      _
    $region43: #{tpu_custom_call.1} parent=1 // pred_check_branch
      %501 = sbr.rel (0) target = $region45
    $region44: #{tpu_custom_call.1} parent=1 // pred_region
      %502 = dma.done [#allocation3], 128
    $region45: #{tpu_custom_call.1} parent=1 // pred_fallthru
      _
    %503 = vsyncpa [#allocation3], 1

</llo_original>
